<compile_context>
chip_gen: v6e
topology: v6e:2x2x1
jax: 0.10.0
libtpu: 0.0.40
codegen_flags: <defaults>
</compile_context>

<pallas_src>
import jax
import jax.numpy as jnp
from jax.experimental import pallas as pl
from jax.experimental.pallas import tpu as pltpu


def _round_up(x: int, m: int) -> int:
    return ((x + m - 1) // m) * m


def toy_model_kernel(x_ref, w1t_ref, b1_ref, w2t_ref, b2_ref, o_ref):
    # x_ref:   (TB, 10)  batch tile (f32 or bf16)
    # w1t_ref: (10, 10)  net1 weight, pre-transposed to (in, out)
    # b1_ref:  (1, 10)   net1 bias (f32)
    # w2t_ref: (10, 5)   net2 weight, pre-transposed to (in, out)
    # b2_ref:  (1, 5)    net2 bias (f32)
    # o_ref:   (TB, 5)   natural-layout output tile (f32)
    x = x_ref[...]

    # net1: x @ W1^T + b1 -> ReLU.  Plain (M,K)@(K,N) MXU matmul, f32 accumulate.
    h = jnp.dot(x, w1t_ref[...], preferred_element_type=jnp.float32)
    h = jnp.maximum(h + b1_ref[...], 0.0)          # bias + ReLU on the VPU (f32)

    # net2: h @ W2^T + b2.  Again plain (M,K)@(K,N); no transposes / relayouts.
    y = jnp.dot(h.astype(w2t_ref.dtype), w2t_ref[...],
                preferred_element_type=jnp.float32)
    o_ref[...] = (y + b2_ref[...]).astype(o_ref.dtype)


def toy_model_forward(x, w1, b1, w2, b2, *, tb=4096, compute_dtype=None):
    """ToyModel forward.

    x: (B, 10); w1: (10, 10) (out, in); b1: (10,); w2: (5, 10) (out, in); b2: (5,).
    Returns (B, 5) in x.dtype.  compute_dtype (e.g. jnp.bfloat16) optionally casts
    x / W1 / W2 at the kernel boundary; accumulation and output stay f32.
    """
    B, in_features = x.shape
    hidden = w1.shape[0]
    out_features = w2.shape[0]
    out_dtype = x.dtype
    cdt = jnp.dtype(compute_dtype) if compute_dtype is not None else jnp.dtype(x.dtype)

    # ---- Batch tile selection -------------------------------------------------
    # Multiple of 128 (aligned sublane dim), clamped to the 128-rounded batch.
    tb = _round_up(max(1, min(tb, _round_up(B, 128))), 128)
    # Prefer >= 4 grid steps (pipeline overlap + v7x megacore sharding) as long
    # as the tile stays >= 512 rows.
    while tb > 512 and _round_up(B, tb) // tb < 4:
        tb = _round_up(tb // 2, 128)
    b_pad = _round_up(B, tb)
    num_tiles = b_pad // tb

    # ---- Wrapper-side layout plumbing (all tiny / free) -----------------------
    x_c = x.astype(cdt)
    if b_pad != B:
        # Padded rows produce garbage values that are sliced off below with [:B].
        x_c = jnp.pad(x_c, ((0, b_pad - B), (0, 0)))
    w1_t = w1.T.astype(cdt)                         # (in, hidden)
    w2_t = w2.T.astype(cdt)                         # (hidden, out)
    b1_r = b1.reshape(1, hidden).astype(jnp.float32)
    b2_r = b2.reshape(1, out_features).astype(jnp.float32)

    # ---- VMEM budget: only raise the scoped limit for large tiles -------------
    # 32 MiB is safe on v5e/v6e (128 MiB physical) and v7x (64 MiB physical) and
    # comfortably holds the double-buffered lane-padded x block + f32 temporaries
    # for tb up to ~16K.
    vmem_limit = (32 * 1024 * 1024) if tb >= 1024 else None

    # Advisory cost hint.  x reads counted lane-padded (the (B, 10) HBM layout
    # pads the minor dim to 128); output / weights as logical bytes.
    flops = 2 * b_pad * in_features * hidden + 2 * b_pad * hidden * out_features
    bytes_accessed = int(
        b_pad * 128 * cdt.itemsize                              # read x (lane-padded)
        + b_pad * out_features * 4                              # write y
        + (in_features * hidden + hidden * out_features) * cdt.itemsize  # weights
        + (hidden + out_features) * 4                           # biases
    )

    out = pl.pallas_call(
        toy_model_kernel,
        out_shape=jax.ShapeDtypeStruct((b_pad, out_features), out_dtype),
        grid_spec=pl.GridSpec(
            grid=(num_tiles,),
            in_specs=[
                # x streams over the batch; weights/biases stay VMEM-resident.
                pl.BlockSpec((tb, in_features), lambda i: (i, 0)),
                pl.BlockSpec((in_features, hidden), lambda i: (0, 0)),
                pl.BlockSpec((1, hidden), lambda i: (0, 0)),
                pl.BlockSpec((hidden, out_features), lambda i: (0, 0)),
                pl.BlockSpec((1, out_features), lambda i: (0, 0)),
            ],
            out_specs=pl.BlockSpec((tb, out_features), lambda i: (i, 0)),
        ),
        compiler_params=pltpu.CompilerParams(
            dimension_semantics=("parallel",),   # batch axis -> both TCs on v7x
            vmem_limit_bytes=vmem_limit,
        ),
        cost_estimate=pl.CostEstimate(
            flops=flops, transcendentals=0, bytes_accessed=bytes_accessed
        ),
    )(x_c, w1_t, b1_r, w2_t, b2_r)

    # Drop batch padding (free slice; no relayout / extra HBM pass).
    return out[:B]


def init_params(key):
    # Deterministic init mirroring the PyTorch module:
    #   net1 = nn.Linear(10, 10) -> default U(-1/sqrt(10), 1/sqrt(10)) for W and b
    #   net2 = nn.Linear(10, 5)  -> weight overridden with N(0, 0.01), bias default
    k1, k2, k3, k4 = jax.random.split(key, 4)
    bound = 1.0 / jnp.sqrt(10.0)
    w1 = jax.random.uniform(k1, (10, 10), jnp.float32, -bound, bound)
    b1 = jax.random.uniform(k2, (10,), jnp.float32, -bound, bound)
    w2 = jax.random.normal(k3, (5, 10), jnp.float32) * 0.01
    b2 = jax.random.uniform(k4, (5,), jnp.float32, -bound, bound)
    return w1, b1, w2, b2


if __name__ == "__main__":
    key = jax.random.PRNGKey(0)
    k_x, k_p = jax.random.split(key)

    # Small demo shapes consistent with the module: (B, 10) -> (B, 5).
    batch = 300  # non-multiple of 128: exercises batch padding; tb=128 -> 3-step grid
    x = jax.random.normal(k_x, (batch, 10), jnp.float32)
    w1, b1, w2, b2 = init_params(k_p)

    # Pure-JAX reference of the forward semantics:
    #   x @ W1^T + b1 -> ReLU -> @ W2^T + b2.
    ref = jnp.maximum(x @ w1.T + b1[None, :], 0.0) @ w2.T + b2[None, :]

    # f32 end-to-end: exact parity with the PyTorch module (multi-step batch grid).
    out_f32 = toy_model_forward(x, w1, b1, w2, b2, tb=128)
    jax.block_until_ready(out_f32)
    assert out_f32.shape == (batch, 5)
    assert jnp.allclose(out_f32, ref, atol=1e-5, rtol=1e-5)

    # Default tile-selection path (tb auto-clamps to the padded batch).
    out_def = toy_model_forward(x, w1, b1, w2, b2)
    jax.block_until_ready(out_def)
    assert jnp.allclose(out_def, ref, atol=1e-5, rtol=1e-5)

    # bf16-input path (halves the dominant x read stream at real batch sizes);
    # accumulation and output stay f32.
    out_bf16 = toy_model_forward(x, w1, b1, w2, b2, tb=128,
                                 compute_dtype=jnp.bfloat16)
    jax.block_until_ready(out_bf16)
    assert jnp.allclose(out_bf16, ref, atol=2e-2, rtol=2e-2)

    print("KERNEL_OK")
</pallas_src>

<mosaic_0001>
module attributes {stable_mosaic.version = 11 : i64} {
  func.func @toy_model_kernel(%arg0: i32, %arg1: memref<128x10xf32, #tpu.memory_space<vmem>>, %arg2: memref<10x10xf32, #tpu.memory_space<vmem>>, %arg3: memref<1x10xf32, #tpu.memory_space<vmem>>, %arg4: memref<10x5xf32, #tpu.memory_space<vmem>>, %arg5: memref<1x5xf32, #tpu.memory_space<vmem>>, %arg6: memref<128x5xf32, #tpu.memory_space<vmem>>) attributes {dimension_semantics = [#tpu.dimension_semantics<parallel>], iteration_bounds = array<i64: 3>, scalar_prefetch = 0 : i64, scratch_operands = 0 : i64, tpu.core_type = #tpu.core_type<tc>, window_params = [{transform_indices = @transform_0, window_bounds = array<i64: 128, 10>}, {pipeline_mode = #tpu.pipeline_mode<synchronous>, transform_indices = @transform_1, window_bounds = array<i64: 10, 10>}, {pipeline_mode = #tpu.pipeline_mode<synchronous>, transform_indices = @transform_2, window_bounds = array<i64: 1, 10>}, {pipeline_mode = #tpu.pipeline_mode<synchronous>, transform_indices = @transform_3, window_bounds = array<i64: 10, 5>}, {pipeline_mode = #tpu.pipeline_mode<synchronous>, transform_indices = @transform_4, window_bounds = array<i64: 1, 5>}, {transform_indices = @transform_5, window_bounds = array<i64: 128, 5>}]} {
    %c0 = arith.constant 0 : index
    %c0_0 = arith.constant 0 : index
    %0 = vector.load %arg1[%c0, %c0_0] : memref<128x10xf32, #tpu.memory_space<vmem>>, vector<128x10xf32>
    %c0_1 = arith.constant 0 : index
    %c0_2 = arith.constant 0 : index
    %1 = vector.load %arg2[%c0_1, %c0_2] : memref<10x10xf32, #tpu.memory_space<vmem>>, vector<10x10xf32>
    %cst = arith.constant dense<0.000000e+00> : vector<128x10xf32>
    %2 = tpu.matmul %0, %1, %cst {dimension_numbers = #tpu.dot_dimension_numbers<[1], [0], [0], [1], [0, 0, 1, 1], [], []>} : vector<128x10xf32>, vector<10x10xf32>, vector<128x10xf32> -> vector<128x10xf32>
    %c0_3 = arith.constant 0 : index
    %c0_4 = arith.constant 0 : index
    %3 = vector.load %arg3[%c0_3, %c0_4] : memref<1x10xf32, #tpu.memory_space<vmem>>, vector<1x10xf32>
    %4 = vector.broadcast %3 : vector<1x10xf32> to vector<128x10xf32>
    %5 = arith.addf %2, %4 : vector<128x10xf32>
    %cst_5 = arith.constant 0.000000e+00 : f32
    %6 = vector.broadcast %cst_5 : f32 to vector<128x10xf32>
    %7 = arith.maximumf %5, %6 : vector<128x10xf32>
    %c0_6 = arith.constant 0 : index
    %c0_7 = arith.constant 0 : index
    %8 = vector.load %arg4[%c0_6, %c0_7] : memref<10x5xf32, #tpu.memory_space<vmem>>, vector<10x5xf32>
    %cst_8 = arith.constant dense<0.000000e+00> : vector<128x5xf32>
    %9 = tpu.matmul %7, %8, %cst_8 {dimension_numbers = #tpu.dot_dimension_numbers<[1], [0], [0], [1], [0, 0, 1, 1], [], []>} : vector<128x10xf32>, vector<10x5xf32>, vector<128x5xf32> -> vector<128x5xf32>
    %c0_9 = arith.constant 0 : index
    %c0_10 = arith.constant 0 : index
    %10 = vector.load %arg5[%c0_9, %c0_10] : memref<1x5xf32, #tpu.memory_space<vmem>>, vector<1x5xf32>
    %11 = vector.broadcast %10 : vector<1x5xf32> to vector<128x5xf32>
    %12 = arith.addf %9, %11 : vector<128x5xf32>
    %c0_11 = arith.constant 0 : index
    %c0_12 = arith.constant 0 : index
    %13 = vector.load %arg6[%c0_11, %c0_12] : memref<128x5xf32, #tpu.memory_space<vmem>>, vector<128x5xf32>
    tpu.vector_store %arg6[%c0_11, %c0_12], %12 {strides = array<i32>} : memref<128x5xf32, #tpu.memory_space<vmem>>, vector<128x5xf32>,
    return
  }
  func.func @transform_0(%arg0: i32) -> (i32, i32) {
    %c0_i32 = arith.constant 0 : i32
    %c0_i32_0 = arith.constant 0 : i32
    return %arg0, %c0_i32 : i32, i32
  }
  func.func @transform_1(%arg0: i32) -> (i32, i32) {
    %c0_i32 = arith.constant 0 : i32
    %c0_i32_0 = arith.constant 0 : i32
    %c0_i32_1 = arith.constant 0 : i32
    return %c0_i32, %c0_i32_0 : i32, i32
  }
  func.func @transform_2(%arg0: i32) -> (i32, i32) {
    %c0_i32 = arith.constant 0 : i32
    %c0_i32_0 = arith.constant 0 : i32
    %c0_i32_1 = arith.constant 0 : i32
    return %c0_i32, %c0_i32_0 : i32, i32
  }
  func.func @transform_3(%arg0: i32) -> (i32, i32) {
    %c0_i32 = arith.constant 0 : i32
    %c0_i32_0 = arith.constant 0 : i32
    %c0_i32_1 = arith.constant 0 : i32
    return %c0_i32, %c0_i32_0 : i32, i32
  }
  func.func @transform_4(%arg0: i32) -> (i32, i32) {
    %c0_i32 = arith.constant 0 : i32
    %c0_i32_0 = arith.constant 0 : i32
    %c0_i32_1 = arith.constant 0 : i32
    return %c0_i32, %c0_i32_0 : i32, i32
  }
  func.func @transform_5(%arg0: i32) -> (i32, i32) {
    %c0_i32 = arith.constant 0 : i32
    %c0_i32_0 = arith.constant 0 : i32
    return %arg0, %c0_i32 : i32, i32
  }
}

</mosaic_0001>

<llo_original>
// kernel: tpu_custom_call.1
$region0: #{tpu_custom_call.1}
  #allocation0 [shape = 'u32[]', space=smem, size = 0x4, offset = 0x4, fixed_abs, tag = 'smem constant byte address 0x4 - core index']
  #allocation1 [shape = 'u32[144,128]{1,0:T(1,128)}', space=vmem, size = 0x12000, scoped, tag = 'internal scratch']
  %s0 = inlined_call_operand.vmem [shape: f32[384,10], index: 0, kind: input, shape index: {}]
  %s1 = inlined_call_operand.vmem [shape: f32[10,10], index: 1, kind: input, shape index: {}]
  %s2 = inlined_call_operand.vmem [shape: f32[1,10], index: 2, kind: input, shape index: {}]
  %s3 = inlined_call_operand.vmem [shape: f32[10,5], index: 3, kind: input, shape index: {}]
  %s4 = inlined_call_operand.vmem [shape: f32[1,5], index: 4, kind: input, shape index: {}]
  %s5 = inlined_call_operand.vmem [shape: f32[384,5], index: 5, kind: output, shape index: {}]
  %s6 = sld [smem:[#allocation0]]
  $region53: #{tpu_custom_call.1} parent=0
    _
  %s8 = ssub.s32 1, %s6
  %s9 = scalar_select 0, %s8, %s6
  loop: start=0, step=1, limit=5
  $region2: #{tpu_custom_call.1} parent=0 // loop_pre_header
    _
  $region3: #{tpu_custom_call.1} parent=0 // loop_header
    %s11 = sphi 0, %s15
    %p12 = scmp.ge.s32.totalorder %s11, 5
    %s21 = sphi 0, %s23
    %s24 = sphi 0, %s21
    %s25 = sphi 0, %s24
    %s41 = sphi 0, %s25
    %s45 = sphi 0, %s45
    %s47 = sphi 0, %s45
    %s48 = sphi 0, %s47
    %s62 = sphi 0, %s48
    %s66 = sphi 0, %s66
    %s68 = sphi 0, %s66
    %s69 = sphi 0, %s68
    %s83 = sphi 0, %s69
    %s87 = sphi 0, %s87
    %s89 = sphi 0, %s87
    %s90 = sphi 0, %s89
    %s104 = sphi 0, %s90
    %s108 = sphi 0, %s108
    %s110 = sphi 0, %s108
    %s111 = sphi 0, %s110
    %s125 = sphi 0, %s111
    %s131 = sphi 0, %s133
    %s134 = sphi 0, %s131
    %s135 = sphi 0, %s134
    %s151 = sphi 0, %s135
  $region4: #{tpu_custom_call.1} parent=0 // loop_header_branch
    %14 = sbr.rel (%p12) target = $region8
  $region5: #{tpu_custom_call.1} parent=0 // loop_body
    %s16 = ssub.s32 %s11, 1
    %s17 = ssub.s32 %s11, 2
    %s18 = sadd.s32 %s11, 1
    %s19 = ssub.s32 %s11, %s18
    %p20 = scmp.eq.s32.totalorder %s19, 0
    %s22 = sadd.s32 %s21, 1
    %s23 = scalar_select %p20, %s21, %s22
    %p26 = pneg %p20
    %p27 = scmp.eq.s32.totalorder %s11, 2
    %p28 = por %p26, %p27
    %p29 = scmp.ne.s32.totalorder %s21, %s24
    %p30 = scmp.eq.s32.totalorder %s11, 0
    %p31 = por %p29, %p30
    %p32 = scmp.ne.s32.totalorder %s21, %s24
    %p33 = scmp.eq.s32.totalorder %s16, 2
    %p34 = por %p32, %p33
    %p35 = scmp.ne.s32.totalorder %s24, %s25
    %p36 = scmp.eq.s32.totalorder %s16, 0
    %p37 = por %p35, %p36
    %p38 = scmp.ne.s32.totalorder %s24, %s25
    %p39 = scmp.eq.s32.totalorder %s17, 2
    %p40 = por %p38, %p39
    %p42 = scmp.ne.s32.totalorder %s25, %s41
    %p43 = scmp.eq.s32.totalorder %s17, 0
    %p44 = por %p42, %p43
    %s46 = sadd.s32 %s45, 1
    %p49 = scmp.eq.s32.totalorder %s11, 2
    %p50 = scmp.ne.s32.totalorder %s45, %s47
    %p51 = scmp.eq.s32.totalorder %s11, 0
    %p52 = por %p50, %p51
    %p53 = scmp.ne.s32.totalorder %s45, %s47
    %p54 = scmp.eq.s32.totalorder %s16, 2
    %p55 = por %p53, %p54
    %p56 = scmp.ne.s32.totalorder %s47, %s48
    %p57 = scmp.eq.s32.totalorder %s16, 0
    %p58 = por %p56, %p57
    %p59 = scmp.ne.s32.totalorder %s47, %s48
    %p60 = scmp.eq.s32.totalorder %s17, 2
    %p61 = por %p59, %p60
    %p63 = scmp.ne.s32.totalorder %s48, %s62
    %p64 = scmp.eq.s32.totalorder %s17, 0
    %p65 = por %p63, %p64
    %s67 = sadd.s32 %s66, 1
    %p70 = scmp.eq.s32.totalorder %s11, 2
    %p71 = scmp.ne.s32.totalorder %s66, %s68
    %p72 = scmp.eq.s32.totalorder %s11, 0
    %p73 = por %p71, %p72
    %p74 = scmp.ne.s32.totalorder %s66, %s68
    %p75 = scmp.eq.s32.totalorder %s16, 2
    %p76 = por %p74, %p75
    %p77 = scmp.ne.s32.totalorder %s68, %s69
    %p78 = scmp.eq.s32.totalorder %s16, 0
    %p79 = por %p77, %p78
    %p80 = scmp.ne.s32.totalorder %s68, %s69
    %p81 = scmp.eq.s32.totalorder %s17, 2
    %p82 = por %p80, %p81
    %p84 = scmp.ne.s32.totalorder %s69, %s83
    %p85 = scmp.eq.s32.totalorder %s17, 0
    %p86 = por %p84, %p85
    %s88 = sadd.s32 %s87, 1
    %p91 = scmp.eq.s32.totalorder %s11, 2
    %p92 = scmp.ne.s32.totalorder %s87, %s89
    %p93 = scmp.eq.s32.totalorder %s11, 0
    %p94 = por %p92, %p93
    %p95 = scmp.ne.s32.totalorder %s87, %s89
    %p96 = scmp.eq.s32.totalorder %s16, 2
    %p97 = por %p95, %p96
    %p98 = scmp.ne.s32.totalorder %s89, %s90
    %p99 = scmp.eq.s32.totalorder %s16, 0
    %p100 = por %p98, %p99
    %p101 = scmp.ne.s32.totalorder %s89, %s90
    %p102 = scmp.eq.s32.totalorder %s17, 2
    %p103 = por %p101, %p102
    %p105 = scmp.ne.s32.totalorder %s90, %s104
    %p106 = scmp.eq.s32.totalorder %s17, 0
    %p107 = por %p105, %p106
    %s109 = sadd.s32 %s108, 1
    %p112 = scmp.eq.s32.totalorder %s11, 2
    %p113 = scmp.ne.s32.totalorder %s108, %s110
    %p114 = scmp.eq.s32.totalorder %s11, 0
    %p115 = por %p113, %p114
    %p116 = scmp.ne.s32.totalorder %s108, %s110
    %p117 = scmp.eq.s32.totalorder %s16, 2
    %p118 = por %p116, %p117
    %p119 = scmp.ne.s32.totalorder %s110, %s111
    %p120 = scmp.eq.s32.totalorder %s16, 0
    %p121 = por %p119, %p120
    %p122 = scmp.ne.s32.totalorder %s110, %s111
    %p123 = scmp.eq.s32.totalorder %s17, 2
    %p124 = por %p122, %p123
    %p126 = scmp.ne.s32.totalorder %s111, %s125
    %p127 = scmp.eq.s32.totalorder %s17, 0
    %p128 = por %p126, %p127
    %s129 = ssub.s32 %s11, %s18
    %p130 = scmp.eq.s32.totalorder %s129, 0
    %s132 = sadd.s32 %s131, 1
    %s133 = scalar_select %p130, %s131, %s132
    %p136 = pneg %p130
    %p137 = scmp.eq.s32.totalorder %s11, 2
    %p138 = por %p136, %p137
    %p139 = scmp.ne.s32.totalorder %s131, %s134
    %p140 = scmp.eq.s32.totalorder %s11, 0
    %p141 = por %p139, %p140
    %p142 = scmp.ne.s32.totalorder %s131, %s134
    %p143 = scmp.eq.s32.totalorder %s16, 2
    %p144 = por %p142, %p143
    %p145 = scmp.ne.s32.totalorder %s134, %s135
    %p146 = scmp.eq.s32.totalorder %s16, 0
    %p147 = por %p145, %p146
    %p148 = scmp.ne.s32.totalorder %s134, %s135
    %p149 = scmp.eq.s32.totalorder %s17, 2
    %p150 = por %p148, %p149
    %p152 = scmp.ne.s32.totalorder %s135, %s151
    %p153 = scmp.eq.s32.totalorder %s17, 0
    %p154 = por %p152, %p153
    %p155 = scmp.le.s32.totalorder 1, %s11
    %p156 = scmp.lt.s32.totalorder %s11, 4
    %p157 = pnand %p155, %p156
    %p158 = pneg %p157
    // Predicated region
    $region9: #{tpu_custom_call.1} parent=5 // pred_check
      _
    $region10: #{tpu_custom_call.1} parent=5 // pred_check_branch
      %160 = sbr.rel (%p157) target = $region12
    $region11: #{tpu_custom_call.1} parent=5 // pred_region
      %s161 = ssub.s32 %s11, 1
      // Predicated region
      $region13: #{tpu_custom_call.1} parent=11 // pred_check
        %p162 = pneg %p58
      $region14: #{tpu_custom_call.1} parent=11 // pred_check_branch
        %164 = sbr.rel (%p162) target = $region16
      $region15: #{tpu_custom_call.1} parent=11 // pred_region
        _
      $region16: #{tpu_custom_call.1} parent=11 // pred_fallthru
        _
      // Predicated region
      $region17: #{tpu_custom_call.1} parent=11 // pred_check
        %p165 = pneg %p79
      $region18: #{tpu_custom_call.1} parent=11 // pred_check_branch
        %167 = sbr.rel (%p165) target = $region20
      $region19: #{tpu_custom_call.1} parent=11 // pred_region
        _
      $region20: #{tpu_custom_call.1} parent=11 // pred_fallthru
        _
      // Predicated region
      $region21: #{tpu_custom_call.1} parent=11 // pred_check
        %p168 = pneg %p100
      $region22: #{tpu_custom_call.1} parent=11 // pred_check_branch
        %170 = sbr.rel (%p168) target = $region24
      $region23: #{tpu_custom_call.1} parent=11 // pred_region
        _
      $region24: #{tpu_custom_call.1} parent=11 // pred_fallthru
        _
      // Predicated region
      $region25: #{tpu_custom_call.1} parent=11 // pred_check
        %p171 = pneg %p121
      $region26: #{tpu_custom_call.1} parent=11 // pred_check_branch
        %173 = sbr.rel (%p171) target = $region28
      $region27: #{tpu_custom_call.1} parent=11 // pred_region
        _
      $region28: #{tpu_custom_call.1} parent=11 // pred_fallthru
        _
    $region12: #{tpu_custom_call.1} parent=5 // pred_fallthru
      _
    %p174 = scmp.lt.s32.totalorder %s11, 3
    // Predicated region
    $region29: #{tpu_custom_call.1} parent=5 // pred_check
      %p175 = pneg %p174
    $region30: #{tpu_custom_call.1} parent=5 // pred_check_branch
      %177 = sbr.rel (%p175) target = $region32
    $region31: #{tpu_custom_call.1} parent=5 // pred_region
      // Predicated region
      $region33: #{tpu_custom_call.1} parent=31 // pred_check
        %p178 = pneg %p31
      $region34: #{tpu_custom_call.1} parent=31 // pred_check_branch
        %180 = sbr.rel (%p178) target = $region36
      $region35: #{tpu_custom_call.1} parent=31 // pred_region
        %s181 = smul.u32 16, %s11
        %p182 = scmp.lt.s32.totalorder %s181, 47
        %s183 = scalar_select %p182, %s181, 47
        %s184 = smul.addr %s183, 8
        %s185 = scalar_lea.vmem %s0, %s184
        %s186 = smul.u32 16, %s11
      $region36: #{tpu_custom_call.1} parent=31 // pred_fallthru
        _
    $region32: #{tpu_custom_call.1} parent=5 // pred_fallthru
      _
    %p187 = scmp.le.s32.totalorder 1, %s11
    %p188 = scmp.lt.s32.totalorder %s11, 4
    %p189 = pnand %p187, %p188
    %p190 = pneg %p189
    // Predicated region
    $region37: #{tpu_custom_call.1} parent=5 // pred_check
      _
    $region38: #{tpu_custom_call.1} parent=5 // pred_check_branch
      %192 = sbr.rel (%p189) target = $region40
    $region39: #{tpu_custom_call.1} parent=5 // pred_region
      %s193 = ssub.s32 %s11, 1
      %s194 = smul.u32 16, %s16
      %p195 = scmp.lt.s32.totalorder %s194, 47
      %s196 = scalar_select %p195, %s194, 47
      %s197 = smul.addr %s196, 8
      %s198 = scalar_lea.vmem %s0, %s197
      %p199 = pneg %p37
      %p200 = pneg %p34
      %p201 = pneg %p58
      %p202 = pneg %p55
      %p203 = pneg %p79
      %p204 = pneg %p76
      %p205 = pneg %p100
      %p206 = pneg %p97
      %p207 = pneg %p121
      %p208 = pneg %p118
      %p209 = pneg %p147
      %p210 = pneg %p144
      %s211 = smul.u32 16, %s16
      %p212 = scmp.lt.s32.totalorder %s211, 47
      %s213 = scalar_select %p212, %s211, 47
      %s214 = smul.addr %s213, 8
      %s215 = scalar_lea.vmem %s5, %s214
      %s216 = smul.u32 16, %s16
      %p217 = scmp.lt.s32.totalorder %s216, 47
      %s218 = scalar_select %p217, %s216, 47
      %s219 = smul.addr %s218, 8
      %s220 = scalar_lea.vmem %s0, %s219
      %s221 = smul.u32 16, %s16
      %s222 = smul.u32 16, %s16
      %p223 = scmp.lt.s32.totalorder %s222, 47
      %s224 = scalar_select %p223, %s222, 47
      %s225 = smul.addr %s224, 8
      %s226 = scalar_lea.vmem %s5, %s225
      %s227 = smul.u32 16, %s16
      %v228 = vld [vmem:[%s220] sm:$0xff]
      %v229 = vld [vmem:[%s220 + $0x8] sm:$0xff]
      %v230 = vld [vmem:[%s220 + $0x10] sm:$0xff]
      %v231 = vld [vmem:[%s220 + $0x18] sm:$0xff]
      %v232 = vld [vmem:[%s220 + $0x20] sm:$0xff]
      %v233 = vld [vmem:[%s220 + $0x28] sm:$0xff]
      %v234 = vld [vmem:[%s220 + $0x30] sm:$0xff]
      %v235 = vld [vmem:[%s220 + $0x38] sm:$0xff]
      %v236 = vld [vmem:[%s220 + $0x40] sm:$0xff]
      %v237 = vld [vmem:[%s220 + $0x48] sm:$0xff]
      %v238 = vld [vmem:[%s220 + $0x50] sm:$0xff]
      %v239 = vld [vmem:[%s220 + $0x58] sm:$0xff]
      %v240 = vld [vmem:[%s220 + $0x60] sm:$0xff]
      %v241 = vld [vmem:[%s220 + $0x68] sm:$0xff]
      %v242 = vld [vmem:[%s220 + $0x70] sm:$0xff]
      %v243 = vld [vmem:[%s220 + $0x78] sm:$0xff]
      %v244 = vld [vmem:[%s1] sm:$0xff]
      %v245 = vld [vmem:[%s1 + $0x8] sm:$0x3]
      %v246 = vld [vmem:[%s2] sm:$0x1]
      %v248 = vlaneseq
      %v249 = vshrl.u32 %v248, 7
      %v250 = vsub.s32 0, %v249
      %v251 = vrot.slane %v246, %v250
      %vm253 = vcmask 80896
      %v255 = vsel %vm253, %v228, 0
      %v258 = vsel %vm253, %v229, 0
      %v261 = vsel %vm253, %v230, 0
      %v264 = vsel %vm253, %v231, 0
      %v267 = vsel %vm253, %v232, 0
      %v270 = vsel %vm253, %v233, 0
      %v273 = vsel %vm253, %v234, 0
      %v276 = vsel %vm253, %v235, 0
      %v279 = vsel %vm253, %v236, 0
      %v282 = vsel %vm253, %v237, 0
      %v285 = vsel %vm253, %v238, 0
      %v288 = vsel %vm253, %v239, 0
      %v291 = vsel %vm253, %v240, 0
      %v294 = vsel %vm253, %v241, 0
      %v297 = vsel %vm253, %v242, 0
      %v300 = vsel %vm253, %v243, 0
      %vm302 = vcmask 1041408
      %v304 = vsel %vm302, %v245, 0
      %306 = vmatprep.subr.mxu0 0.0
      %307 = vmatpush1.msra.mxu0 0.0
      %308 = vmatprep.subr.mxu0 0.0
      %309 = vmatpush1.msra.mxu0 0.0
      %310 = vmatprep.subr.mxu0 0.0
      %311 = vmatpush1.msra.mxu0 0.0
      %312 = vmatprep.subr.mxu0 0.0
      %313 = vmatpush1.msra.mxu0 0.0
      %314 = vmatprep.subr.mxu0 0.0
      %315 = vmatpush1.msra.mxu0 0.0
      %316 = vmatprep.subr.mxu0 0.0
      %317 = vmatpush1.msra.mxu0 0.0
      %318 = vmatprep.subr.mxu0 0.0
      %319 = vmatpush1.msra.mxu0 0.0
      %320 = vmatprep.subr.mxu0 0.0
      %321 = vmatpush1.msra.mxu0 0.0
      %322 = vmatprep.subr.mxu0 0.0
      %323 = vmatpush1.msra.mxu0 0.0
      %324 = vmatprep.subr.mxu0 0.0
      %325 = vmatpush1.msra.mxu0 0.0
      %326 = vmatprep.subr.mxu0 0.0
      %327 = vmatpush1.msra.mxu0 0.0
      %328 = vmatprep.subr.mxu0 0.0
      %329 = vmatpush1.msra.mxu0 0.0
      %330 = vmatprep.subr.mxu0 0.0
      %331 = vmatpush1.msra.mxu0 0.0
      %332 = vmatprep.subr.mxu0 0.0
      %333 = vmatpush1.msra.mxu0 0.0
      %334 = vmatprep.subr.mxu0 0.0
      %335 = vmatpush1.msra.mxu0 %v304
      %336 = vmatprep.subr.mxu0 0.0
      %337 = vmatpush1.msra.mxu0 %v244
      %338 = vmatprep.subr.mxu0 0.0
      %339 = vmatpush2.msra.mxu0 0.0
      %340 = vmatprep.subr.mxu0 0.0
      %341 = vmatpush2.msra.mxu0 0.0
      %342 = vmatprep.subr.mxu0 0.0
      %343 = vmatpush2.msra.mxu0 0.0
      %344 = vmatprep.subr.mxu0 0.0
      %345 = vmatpush2.msra.mxu0 0.0
      %346 = vmatprep.subr.mxu0 0.0
      %347 = vmatpush2.msra.mxu0 0.0
      %348 = vmatprep.subr.mxu0 0.0
      %349 = vmatpush2.msra.mxu0 0.0
      %350 = vmatprep.subr.mxu0 0.0
      %351 = vmatpush2.msra.mxu0 0.0
      %352 = vmatprep.subr.mxu0 0.0
      %353 = vmatpush2.msra.mxu0 0.0
      %354 = vmatprep.subr.mxu0 0.0
      %355 = vmatpush2.msra.mxu0 0.0
      %356 = vmatprep.subr.mxu0 0.0
      %357 = vmatpush2.msra.mxu0 0.0
      %358 = vmatprep.subr.mxu0 0.0
      %359 = vmatpush2.msra.mxu0 0.0
      %360 = vmatprep.subr.mxu0 0.0
      %361 = vmatpush2.msra.mxu0 0.0
      %362 = vmatprep.subr.mxu0 0.0
      %363 = vmatpush2.msra.mxu0 0.0
      %364 = vmatprep.subr.mxu0 0.0
      %365 = vmatpush2.msra.mxu0 0.0
      %366 = vmatprep.subr.mxu0 0.0
      %367 = vmatpush2.msra.mxu0 0.0
      %368 = vmatprep.subr.mxu0 0.0
      %369 = vmatpush2.msra.mxu0 0.0
      %370 = vmatprep.mubr.f32.mxu0 0.0
      %371 = vmatmul.mubr.f32.gmra.mxu0 %v255
      %v372 = vpop.f32.mrf.mxu0
      %v373 = vadd.f32 %v251, %v372
      %v374 = vpop.f32.mrf.mxu0
      %375 = vmatprep.mubr.f32.mxu0 0.0
      %376 = vmatmul.mubr.f32.gmra.mxu0 %v258
      %v377 = vpop.f32.mrf.mxu0
      %v378 = vadd.f32 %v251, %v377
      %v379 = vpop.f32.mrf.mxu0
      %380 = vmatprep.mubr.f32.mxu0 0.0
      %381 = vmatmul.mubr.f32.gmra.mxu0 %v261
      %v382 = vpop.f32.mrf.mxu0
      %v383 = vadd.f32 %v251, %v382
      %v384 = vpop.f32.mrf.mxu0
      %385 = vmatprep.mubr.f32.mxu0 0.0
      %386 = vmatmul.mubr.f32.gmra.mxu0 %v264
      %v387 = vpop.f32.mrf.mxu0
      %v388 = vadd.f32 %v251, %v387
      %v389 = vpop.f32.mrf.mxu0
      %390 = vmatprep.mubr.f32.mxu0 0.0
      %391 = vmatmul.mubr.f32.gmra.mxu0 %v267
      %v392 = vpop.f32.mrf.mxu0
      %v393 = vadd.f32 %v251, %v392
      %v394 = vpop.f32.mrf.mxu0
      %395 = vmatprep.mubr.f32.mxu0 0.0
      %396 = vmatmul.mubr.f32.gmra.mxu0 %v270
      %v397 = vpop.f32.mrf.mxu0
      %v398 = vadd.f32 %v251, %v397
      %v399 = vpop.f32.mrf.mxu0
      %400 = vmatprep.mubr.f32.mxu0 0.0
      %401 = vmatmul.mubr.f32.gmra.mxu0 %v273
      %v402 = vpop.f32.mrf.mxu0
      %v403 = vadd.f32 %v251, %v402
      %v404 = vpop.f32.mrf.mxu0
      %405 = vmatprep.mubr.f32.mxu0 0.0
      %406 = vmatmul.mubr.f32.gmra.mxu0 %v276
      %v407 = vpop.f32.mrf.mxu0
      %v408 = vadd.f32 %v251, %v407
      %v409 = vpop.f32.mrf.mxu0
      %410 = vmatprep.mubr.f32.mxu0 0.0
      %411 = vmatmul.mubr.f32.gmra.mxu0 %v279
      %v412 = vpop.f32.mrf.mxu0
      %v413 = vadd.f32 %v251, %v412
      %v414 = vpop.f32.mrf.mxu0
      %415 = vmatprep.mubr.f32.mxu0 0.0
      %416 = vmatmul.mubr.f32.gmra.mxu0 %v282
      %v417 = vpop.f32.mrf.mxu0
      %v418 = vadd.f32 %v251, %v417
      %v419 = vpop.f32.mrf.mxu0
      %420 = vmatprep.mubr.f32.mxu0 0.0
      %421 = vmatmul.mubr.f32.gmra.mxu0 %v285
      %v422 = vpop.f32.mrf.mxu0
      %v423 = vadd.f32 %v251, %v422
      %v424 = vpop.f32.mrf.mxu0
      %425 = vmatprep.mubr.f32.mxu0 0.0
      %426 = vmatmul.mubr.f32.gmra.mxu0 %v288
      %v427 = vpop.f32.mrf.mxu0
      %v428 = vadd.f32 %v251, %v427
      %v429 = vpop.f32.mrf.mxu0
      %430 = vmatprep.mubr.f32.mxu0 0.0
      %431 = vmatmul.mubr.f32.gmra.mxu0 %v291
      %v432 = vpop.f32.mrf.mxu0
      %v433 = vadd.f32 %v251, %v432
      %v434 = vpop.f32.mrf.mxu0
      %435 = vmatprep.mubr.f32.mxu0 0.0
      %436 = vmatmul.mubr.f32.gmra.mxu0 %v294
      %v437 = vpop.f32.mrf.mxu0
      %v438 = vadd.f32 %v251, %v437
      %v439 = vpop.f32.mrf.mxu0
      %440 = vmatprep.mubr.f32.mxu0 0.0
      %441 = vmatmul.mubr.f32.gmra.mxu0 %v297
      %v442 = vpop.f32.mrf.mxu0
      %v443 = vadd.f32 %v251, %v442
      %v444 = vpop.f32.mrf.mxu0
      %445 = vmatprep.mubr.f32.mxu0 0.0
      %446 = vmatmul.mubr.f32.gmra.mxu0 %v300
      %v447 = vpop.f32.mrf.mxu0
      %v448 = vadd.f32 %v251, %v447
      %v449 = vpop.f32.mrf.mxu0
      %450 = vdwg.mxu0
      %v451 = vmax.f32 %v373, 0.0
      %v452 = vmax.f32 %v378, 0.0
      %v453 = vmax.f32 %v383, 0.0
      %v454 = vmax.f32 %v388, 0.0
      %v455 = vmax.f32 %v393, 0.0
      %v456 = vmax.f32 %v398, 0.0
      %v457 = vmax.f32 %v403, 0.0
      %v458 = vmax.f32 %v408, 0.0
      %v459 = vmax.f32 %v413, 0.0
      %v460 = vmax.f32 %v418, 0.0
      %v461 = vmax.f32 %v423, 0.0
      %v462 = vmax.f32 %v428, 0.0
      %v463 = vmax.f32 %v433, 0.0
      %v464 = vmax.f32 %v438, 0.0
      %v465 = vmax.f32 %v443, 0.0
      %v466 = vmax.f32 %v448, 0.0
      %v467 = vld [vmem:[%s3] sm:$0xff]
      %v468 = vld [vmem:[%s3 + $0x8] sm:$0x3]
      %v469 = vld [vmem:[%s4] sm:$0x1]
      %v471 = vlaneseq
      %v472 = vshrl.u32 %v471, 7
      %v473 = vsub.s32 0, %v472
      %v474 = vrot.slane %v469, %v473
      %v477 = vsel %vm253, %v451, 0
      %v480 = vsel %vm253, %v452, 0
      %v483 = vsel %vm253, %v453, 0
      %v486 = vsel %vm253, %v454, 0
      %v489 = vsel %vm253, %v455, 0
      %v492 = vsel %vm253, %v456, 0
      %v495 = vsel %vm253, %v457, 0
      %v498 = vsel %vm253, %v458, 0
      %v501 = vsel %vm253, %v459, 0
      %v504 = vsel %vm253, %v460, 0
      %v507 = vsel %vm253, %v461, 0
      %v510 = vsel %vm253, %v462, 0
      %v513 = vsel %vm253, %v463, 0
      %v516 = vsel %vm253, %v464, 0
      %v519 = vsel %vm253, %v465, 0
      %v522 = vsel %vm253, %v466, 0
      %v525 = vsel %vm302, %v468, 0
      %527 = vmatprep.subr.mxu0 0.0
      %528 = vmatpush1.msra.mxu0 0.0
      %529 = vmatprep.subr.mxu0 0.0
      %530 = vmatpush1.msra.mxu0 0.0
      %531 = vmatprep.subr.mxu0 0.0
      %532 = vmatpush1.msra.mxu0 0.0
      %533 = vmatprep.subr.mxu0 0.0
      %534 = vmatpush1.msra.mxu0 0.0
      %535 = vmatprep.subr.mxu0 0.0
      %536 = vmatpush1.msra.mxu0 0.0
      %537 = vmatprep.subr.mxu0 0.0
      %538 = vmatpush1.msra.mxu0 0.0
      %539 = vmatprep.subr.mxu0 0.0
      %540 = vmatpush1.msra.mxu0 0.0
      %541 = vmatprep.subr.mxu0 0.0
      %542 = vmatpush1.msra.mxu0 0.0
      %543 = vmatprep.subr.mxu0 0.0
      %544 = vmatpush1.msra.mxu0 0.0
      %545 = vmatprep.subr.mxu0 0.0
      %546 = vmatpush1.msra.mxu0 0.0
      %547 = vmatprep.subr.mxu0 0.0
      %548 = vmatpush1.msra.mxu0 0.0
      %549 = vmatprep.subr.mxu0 0.0
      %550 = vmatpush1.msra.mxu0 0.0
      %551 = vmatprep.subr.mxu0 0.0
      %552 = vmatpush1.msra.mxu0 0.0
      %553 = vmatprep.subr.mxu0 0.0
      %554 = vmatpush1.msra.mxu0 0.0
      %555 = vmatprep.subr.mxu0 0.0
      %556 = vmatpush1.msra.mxu0 %v525
      %557 = vmatprep.subr.mxu0 0.0
      %558 = vmatpush1.msra.mxu0 %v467
      %559 = vmatprep.subr.mxu0 0.0
      %560 = vmatpush2.msra.mxu0 0.0
      %561 = vmatprep.subr.mxu0 0.0
      %562 = vmatpush2.msra.mxu0 0.0
      %563 = vmatprep.subr.mxu0 0.0
      %564 = vmatpush2.msra.mxu0 0.0
      %565 = vmatprep.subr.mxu0 0.0
      %566 = vmatpush2.msra.mxu0 0.0
      %567 = vmatprep.subr.mxu0 0.0
      %568 = vmatpush2.msra.mxu0 0.0
      %569 = vmatprep.subr.mxu0 0.0
      %570 = vmatpush2.msra.mxu0 0.0
      %571 = vmatprep.subr.mxu0 0.0
      %572 = vmatpush2.msra.mxu0 0.0
      %573 = vmatprep.subr.mxu0 0.0
      %574 = vmatpush2.msra.mxu0 0.0
      %575 = vmatprep.subr.mxu0 0.0
      %576 = vmatpush2.msra.mxu0 0.0
      %577 = vmatprep.subr.mxu0 0.0
      %578 = vmatpush2.msra.mxu0 0.0
      %579 = vmatprep.subr.mxu0 0.0
      %580 = vmatpush2.msra.mxu0 0.0
      %581 = vmatprep.subr.mxu0 0.0
      %582 = vmatpush2.msra.mxu0 0.0
      %583 = vmatprep.subr.mxu0 0.0
      %584 = vmatpush2.msra.mxu0 0.0
      %585 = vmatprep.subr.mxu0 0.0
      %586 = vmatpush2.msra.mxu0 0.0
      %587 = vmatprep.subr.mxu0 0.0
      %588 = vmatpush2.msra.mxu0 0.0
      %589 = vmatprep.subr.mxu0 0.0
      %590 = vmatpush2.msra.mxu0 0.0
      %591 = vmatprep.mubr.f32.mxu0 0.0
      %592 = vmatmul.mubr.f32.gmra.mxu0 %v477
      %v593 = vpop.f32.mrf.mxu0
      %v594 = vadd.f32 %v474, %v593
      %v595 = vpop.f32.mrf.mxu0
      %596 = vmatprep.mubr.f32.mxu0 0.0
      %597 = vmatmul.mubr.f32.gmra.mxu0 %v480
      %v598 = vpop.f32.mrf.mxu0
      %v599 = vadd.f32 %v474, %v598
      %v600 = vpop.f32.mrf.mxu0
      %601 = vmatprep.mubr.f32.mxu0 0.0
      %602 = vmatmul.mubr.f32.gmra.mxu0 %v483
      %v603 = vpop.f32.mrf.mxu0
      %v604 = vadd.f32 %v474, %v603
      %v605 = vpop.f32.mrf.mxu0
      %606 = vmatprep.mubr.f32.mxu0 0.0
      %607 = vmatmul.mubr.f32.gmra.mxu0 %v486
      %v608 = vpop.f32.mrf.mxu0
      %v609 = vadd.f32 %v474, %v608
      %v610 = vpop.f32.mrf.mxu0
      %611 = vmatprep.mubr.f32.mxu0 0.0
      %612 = vmatmul.mubr.f32.gmra.mxu0 %v489
      %v613 = vpop.f32.mrf.mxu0
      %v614 = vadd.f32 %v474, %v613
      %v615 = vpop.f32.mrf.mxu0
      %616 = vmatprep.mubr.f32.mxu0 0.0
      %617 = vmatmul.mubr.f32.gmra.mxu0 %v492
      %v618 = vpop.f32.mrf.mxu0
      %v619 = vadd.f32 %v474, %v618
      %v620 = vpop.f32.mrf.mxu0
      %621 = vmatprep.mubr.f32.mxu0 0.0
      %622 = vmatmul.mubr.f32.gmra.mxu0 %v495
      %v623 = vpop.f32.mrf.mxu0
      %v624 = vadd.f32 %v474, %v623
      %v625 = vpop.f32.mrf.mxu0
      %626 = vmatprep.mubr.f32.mxu0 0.0
      %627 = vmatmul.mubr.f32.gmra.mxu0 %v498
      %v628 = vpop.f32.mrf.mxu0
      %v629 = vadd.f32 %v474, %v628
      %v630 = vpop.f32.mrf.mxu0
      %631 = vmatprep.mubr.f32.mxu0 0.0
      %632 = vmatmul.mubr.f32.gmra.mxu0 %v501
      %v633 = vpop.f32.mrf.mxu0
      %v634 = vadd.f32 %v474, %v633
      %v635 = vpop.f32.mrf.mxu0
      %636 = vmatprep.mubr.f32.mxu0 0.0
      %637 = vmatmul.mubr.f32.gmra.mxu0 %v504
      %v638 = vpop.f32.mrf.mxu0
      %v639 = vadd.f32 %v474, %v638
      %v640 = vpop.f32.mrf.mxu0
      %641 = vmatprep.mubr.f32.mxu0 0.0
      %642 = vmatmul.mubr.f32.gmra.mxu0 %v507
      %v643 = vpop.f32.mrf.mxu0
      %v644 = vadd.f32 %v474, %v643
      %v645 = vpop.f32.mrf.mxu0
      %646 = vmatprep.mubr.f32.mxu0 0.0
      %647 = vmatmul.mubr.f32.gmra.mxu0 %v510
      %v648 = vpop.f32.mrf.mxu0
      %v649 = vadd.f32 %v474, %v648
      %v650 = vpop.f32.mrf.mxu0
      %651 = vmatprep.mubr.f32.mxu0 0.0
      %652 = vmatmul.mubr.f32.gmra.mxu0 %v513
      %v653 = vpop.f32.mrf.mxu0
      %v654 = vadd.f32 %v474, %v653
      %v655 = vpop.f32.mrf.mxu0
      %656 = vmatprep.mubr.f32.mxu0 0.0
      %657 = vmatmul.mubr.f32.gmra.mxu0 %v516
      %v658 = vpop.f32.mrf.mxu0
      %v659 = vadd.f32 %v474, %v658
      %v660 = vpop.f32.mrf.mxu0
      %661 = vmatprep.mubr.f32.mxu0 0.0
      %662 = vmatmul.mubr.f32.gmra.mxu0 %v519
      %v663 = vpop.f32.mrf.mxu0
      %v664 = vadd.f32 %v474, %v663
      %v665 = vpop.f32.mrf.mxu0
      %666 = vmatprep.mubr.f32.mxu0 0.0
      %667 = vmatmul.mubr.f32.gmra.mxu0 %v522
      %v668 = vpop.f32.mrf.mxu0
      %v669 = vadd.f32 %v474, %v668
      %v670 = vpop.f32.mrf.mxu0
      %671 = vdwg.mxu0
      %vm672 = vcmask 39936
      %673 = vst.msk [vmem:[%s226] sm:$0xff] %vm672, %v594
      %674 = vst.msk [vmem:[%s226 + $0x8] sm:$0xff] %vm672, %v599
      %675 = vst.msk [vmem:[%s226 + $0x10] sm:$0xff] %vm672, %v604
      %676 = vst.msk [vmem:[%s226 + $0x18] sm:$0xff] %vm672, %v609
      %677 = vst.msk [vmem:[%s226 + $0x20] sm:$0xff] %vm672, %v614
      %678 = vst.msk [vmem:[%s226 + $0x28] sm:$0xff] %vm672, %v619
      %679 = vst.msk [vmem:[%s226 + $0x30] sm:$0xff] %vm672, %v624
      %680 = vst.msk [vmem:[%s226 + $0x38] sm:$0xff] %vm672, %v629
      %681 = vst.msk [vmem:[%s226 + $0x40] sm:$0xff] %vm672, %v634
      %682 = vst.msk [vmem:[%s226 + $0x48] sm:$0xff] %vm672, %v639
      %683 = vst.msk [vmem:[%s226 + $0x50] sm:$0xff] %vm672, %v644
      %684 = vst.msk [vmem:[%s226 + $0x58] sm:$0xff] %vm672, %v649
      %685 = vst.msk [vmem:[%s226 + $0x60] sm:$0xff] %vm672, %v654
      %686 = vst.msk [vmem:[%s226 + $0x68] sm:$0xff] %vm672, %v659
      %687 = vst.msk [vmem:[%s226 + $0x70] sm:$0xff] %vm672, %v664
      %688 = vst.msk [vmem:[%s226 + $0x78] sm:$0xff] %vm672, %v669
      %s689 = smul.u32 16, %s16
      %p690 = scmp.lt.s32.totalorder %s689, 47
      %s691 = scalar_select %p690, %s689, 47
      %s692 = smul.addr %s691, 8
      %s693 = scalar_lea.vmem %s5, %s692
      // Predicated region
      $region41: #{tpu_custom_call.1} parent=39 // pred_check
        %p694 = pneg %p144
      $region42: #{tpu_custom_call.1} parent=39 // pred_check_branch
        %696 = sbr.rel (%p694) target = $region44
      $region43: #{tpu_custom_call.1} parent=39 // pred_region
        %s697 = smul.u32 16, %s16
      $region44: #{tpu_custom_call.1} parent=39 // pred_fallthru
        _
    $region40: #{tpu_custom_call.1} parent=5 // pred_fallthru
      _
    %p698 = scmp.le.s32.totalorder 2, %s11
    // Predicated region
    $region45: #{tpu_custom_call.1} parent=5 // pred_check
      %p699 = pneg %p698
    $region46: #{tpu_custom_call.1} parent=5 // pred_check_branch
      %701 = sbr.rel (%p699) target = $region48
    $region47: #{tpu_custom_call.1} parent=5 // pred_region
      %s702 = ssub.s32 %s11, 2
      // Predicated region
      $region49: #{tpu_custom_call.1} parent=47 // pred_check
        %p703 = pneg %p150
      $region50: #{tpu_custom_call.1} parent=47 // pred_check_branch
        %705 = sbr.rel (%p703) target = $region52
      $region51: #{tpu_custom_call.1} parent=47 // pred_region
        %s706 = smul.u32 16, %s17
        %p707 = scmp.lt.s32.totalorder %s706, 47
        %s708 = scalar_select %p707, %s706, 47
        %s709 = smul.addr %s708, 8
        %s710 = scalar_lea.vmem %s5, %s709
      $region52: #{tpu_custom_call.1} parent=47 // pred_fallthru
        _
    $region48: #{tpu_custom_call.1} parent=5 // pred_fallthru
      _
  $region6: #{tpu_custom_call.1} parent=0 // loop_footer
    %s15 = sadd.s32 1, %s11
  $region7: #{tpu_custom_call.1} parent=0 // loop_footer_branch
    %10 = sbr.rel target = $region3
  $region8: #{tpu_custom_call.1} parent=0 // loop_exit
    _

</llo_original>
